<compile_context>
chip_gen: v7x
topology: tpu7x:2x2x1
jax: 0.10.0
libtpu: 0.0.40
codegen_flags: <defaults>
</compile_context>

<pallas_src>
import numpy as np
import jax
import jax.numpy as jnp
from jax.experimental import pallas as pl
from jax.experimental.pallas import tpu as pltpu

ODE_UNFOLDS = 6          # ncps LTCCell default
EPSILON = 1e-8           # ncps LTCCell default
LANE = 128               # TPU vreg lane width

INTER, COMMAND, MOTOR = 18, 12, 4
UNITS = INTER + COMMAND + MOTOR          # 34 = LTCCell state_size


# ----------------------------------------------------------------------------
# Kernel 1: sensory-synapse reduction over the huge flattened-feature axis S.
# Grid = (ncores, steps_per_core); each core accumulates its own lane-partial
# numerator/denominator directly into a resident output block.
# ----------------------------------------------------------------------------
def _sensory_kernel(x_ref, smu_ref, ssig_ref, swm_ref, swe_ref, num_ref, den_ref):
    """x_ref:            (B, tile_s) f32   affine-mapped input chunk
       smu/ssig/swm/swe: (U, tile_s) bf16  transposed sensory params
                                           (wm = w*mask, we = wm*erev pre-folded)
       num_ref/den_ref:  (1, B, U, LANE) f32 per-core lane-partial accumulators"""
    k = pl.program_id(1)                      # reduction step within this core's slice

    @pl.when(k == 0)
    def _():
        num_ref[...] = jnp.zeros_like(num_ref)
        den_ref[...] = jnp.zeros_like(den_ref)

    tile_s = x_ref.shape[1]
    n_grp = tile_s // LANE

    def lane_group(g):
        sl = slice(g * LANE, (g + 1) * LANE)
        xg = x_ref[:, sl]                                     # (B, LANE) f32
        mu = smu_ref[:, sl].astype(jnp.float32)               # (U, LANE)
        sig = ssig_ref[:, sl].astype(jnp.float32)
        wm = swm_ref[:, sl].astype(jnp.float32)
        we = swe_ref[:, sl].astype(jnp.float32)
        s = jax.nn.sigmoid(sig[None] * (xg[:, None, :] - mu[None]))   # (B, U, LANE)
        return we[None] * s, wm[None] * s

    num_p, den_p = lane_group(0)
    for g in range(1, n_grp):                 # static unroll: pure VPU adds, no XLU
        pn, pd = lane_group(g)
        num_p = num_p + pn
        den_p = den_p + pd

    num_ref[...] += num_p[None]
    den_ref[...] += den_p[None]


# ----------------------------------------------------------------------------
# Kernel 2: tiny epilogue — combine core/lane partials, run the 6 fused
# semi-implicit Euler unfolds on the 34-neuron state, affine output map.
# ----------------------------------------------------------------------------
def _ode_kernel(num_ref, den_ref, state_ref,
                rmu_ref, rsig_ref, rwm_ref, rwe_ref,
                gleak_ref, vleak_ref, cm_ref, ow_ref, ob_ref,
                next_state_ref, motor_ref):
    w_num_s = num_ref[...].sum(axis=3).sum(axis=0)            # (B, U): single XLU reduce
    w_den_s = den_ref[...].sum(axis=3).sum(axis=0)

    r_mu = rmu_ref[...][None]                                 # (1, U, U)
    r_sig = rsig_ref[...][None]
    r_wm = rwm_ref[...][None]                                 # w * sparsity_mask
    r_we = rwe_ref[...][None]                                 # w * sparsity_mask * erev
    gleak = gleak_ref[...]                                    # (1, U)
    vleak = vleak_ref[...]
    cm_t = cm_ref[...] * float(ODE_UNFOLDS)                   # elapsed_time = 1.0

    v = state_ref[...]                                        # (B, U)
    for _ in range(ODE_UNFOLDS):                              # static, fully unrolled
        sr = jax.nn.sigmoid(r_sig * (v[:, :, None] - r_mu))   # (B, U_src, U_dst)
        w_num = jnp.sum(r_we * sr, axis=1) + w_num_s
        w_den = jnp.sum(r_wm * sr, axis=1) + w_den_s
        num = cm_t * v + gleak * vleak + w_num
        den = cm_t + gleak + w_den
        v = num / (den + EPSILON)

    next_state_ref[...] = v
    motor_ref[...] = v[:, :MOTOR] * ow_ref[...] + ob_ref[...]   # affine output map


# ----------------------------------------------------------------------------
# Wrapper
# ----------------------------------------------------------------------------
def ltc_cell_pallas(x, state, kp, tile_s=2048, ncores=2):
    """x: (B, S) flattened encoder output; state: (1 or B, U). Returns (motor, next_state)."""
    B, S = x.shape
    U = UNITS
    S_pad = kp["s_mu"].shape[1]
    assert tile_s % LANE == 0
    assert S_pad % (ncores * tile_s) == 0, "prepare_params pad_multiple must equal ncores*tile_s"
    assert S_pad >= S

    # Affine input map folded into the wrapper (plain XLA); zero-pad the sensory
    # axis — padded columns carry zero folded weights, so they contribute nothing.
    xin = x.astype(jnp.float32) * kp["input_w"] + kp["input_b"]
    if S_pad != S:
        xin = jnp.pad(xin, ((0, 0), (0, S_pad - S)))
    state_b = jnp.broadcast_to(state, (B, U)).astype(jnp.float32)

    kpc = S_pad // (ncores * tile_s)                           # reduction steps per core
    grid = (ncores, kpc)

    def col_spec(rows):
        return pl.BlockSpec((rows, tile_s), lambda c, k: (0, c * kpc + k))

    def acc_spec():
        return pl.BlockSpec((1, B, U, LANE), lambda c, k: (c, 0, 0, 0))

    num_out, den_out = pl.pallas_call(
        _sensory_kernel,
        grid_spec=pltpu.PrefetchScalarGridSpec(
            num_scalar_prefetch=0,
            grid=grid,
            in_specs=[col_spec(B), col_spec(U), col_spec(U), col_spec(U), col_spec(U)],
            out_specs=[acc_spec(), acc_spec()],
        ),
        out_shape=[jax.ShapeDtypeStruct((ncores, B, U, LANE), jnp.float32),
                   jax.ShapeDtypeStruct((ncores, B, U, LANE), jnp.float32)],
        compiler_params=pltpu.CompilerParams(
            dimension_semantics=("parallel", "arbitrary"),
            vmem_limit_bytes=32 * 1024 * 1024),
    )(xin, kp["s_mu"], kp["s_sigma"], kp["s_wm"], kp["s_we"])

    # Tiny epilogue: combine partials + 6 ODE unfolds + affine output map.
    next_state, motor = pl.pallas_call(
        _ode_kernel,
        out_shape=[jax.ShapeDtypeStruct((B, U), jnp.float32),
                   jax.ShapeDtypeStruct((B, MOTOR), jnp.float32)],
    )(num_out, den_out, state_b,
      kp["r_mu"], kp["r_sigma"], kp["r_wm"], kp["r_we"],
      kp["gleak"], kp["vleak"], kp["cm"], kp["output_w"], kp["output_b"])
    return motor, next_state


# ----------------------------------------------------------------------------
# Deterministic parameter init (same init ranges as ncps LTCCell), natural (S,U) layout.
# ----------------------------------------------------------------------------
def init_params(key, sensory_size, units):
    ks = jax.random.split(key, 11)
    u = lambda k, shape, lo, hi: jax.random.uniform(k, shape, jnp.float32, lo, hi)

    # TODO(synk): exact ncps.wirings.NCP connectivity (seed=22222, fanouts/fanin)
    # is replaced here by a deterministic synthetic sparse +/-1 adjacency.
    def adjacency(k, shape, density=0.3):
        k1, k2 = jax.random.split(k)
        conn = (jax.random.uniform(k1, shape) < density).astype(jnp.float32)
        sign = jnp.where(jax.random.uniform(k2, shape) < 0.5, -1.0, 1.0)
        return conn * sign

    return dict(
        gleak=u(ks[0], (1, units), 0.001, 1.0),
        vleak=u(ks[1], (1, units), -0.2, 0.2),
        cm=u(ks[2], (1, units), 0.4, 0.6),
        w=u(ks[3], (units, units), 0.001, 1.0),
        sigma=u(ks[4], (units, units), 3.0, 8.0),
        mu=u(ks[5], (units, units), 0.3, 0.8),
        sensory_w=u(ks[6], (sensory_size, units), 0.001, 1.0),
        sensory_sigma=u(ks[7], (sensory_size, units), 3.0, 8.0),
        sensory_mu=u(ks[8], (sensory_size, units), 0.3, 0.8),
        erev=adjacency(ks[9], (units, units)),
        sensory_erev=adjacency(ks[10], (sensory_size, units)),
        input_w=jnp.ones((1, sensory_size), jnp.float32),
        input_b=jnp.zeros((1, sensory_size), jnp.float32),
        output_w=jnp.ones((1, MOTOR), jnp.float32),
        output_b=jnp.zeros((1, MOTOR), jnp.float32),
    )


def prepare_params(p, pad_multiple):
    """Kernel-layout params: explicit 0/1 sparsity mask folded into the weights,
    sensory tensors transposed to (U, S) (S on the lane axis), zero-padded along S
    to a multiple of pad_multiple, and stored bf16 in HBM (compute stays f32)."""
    S = p["sensory_mu"].shape[0]
    S_pad = ((S + pad_multiple - 1) // pad_multiple) * pad_multiple
    pad = S_pad - S

    s_mask = jnp.abs(p["sensory_erev"])          # explicit sparsity mask (erev in {-1,0,1})
    s_wm = p["sensory_w"] * s_mask
    s_we = s_wm * p["sensory_erev"]
    r_mask = jnp.abs(p["erev"])
    r_wm = p["w"] * r_mask
    r_we = r_wm * p["erev"]

    def sensory(a):                              # (S, U) -> (U, S_pad) bf16
        a = a.T
        if pad:
            a = jnp.pad(a, ((0, 0), (0, pad)))
        return a.astype(jnp.bfloat16)

    return dict(
        s_mu=sensory(p["sensory_mu"]), s_sigma=sensory(p["sensory_sigma"]),
        s_wm=sensory(s_wm), s_we=sensory(s_we),
        r_mu=p["mu"], r_sigma=p["sigma"], r_wm=r_wm, r_we=r_we,
        gleak=p["gleak"], vleak=p["vleak"], cm=p["cm"],
        input_w=p["input_w"], input_b=p["input_b"],
        output_w=p["output_w"], output_b=p["output_b"],
    )


# Pure-JAX reference (mirrors ncps.torch.LTCCell.forward) on the same
# bf16-rounded parameter values the kernel consumes.
def ltc_cell_ref(x, state, kp):
    B, S = x.shape
    U = UNITS
    S_pad = kp["s_mu"].shape[1]
    xin = x.astype(jnp.float32) * kp["input_w"] + kp["input_b"]
    if S_pad != S:
        xin = jnp.pad(xin, ((0, 0), (0, S_pad - S)))
    smu = kp["s_mu"].astype(jnp.float32)
    ssig = kp["s_sigma"].astype(jnp.float32)
    swm = kp["s_wm"].astype(jnp.float32)
    swe = kp["s_we"].astype(jnp.float32)
    s = jax.nn.sigmoid(ssig[None] * (xin[:, None, :] - smu[None]))   # (B, U, S_pad)
    w_num_s = jnp.sum(swe[None] * s, axis=2)
    w_den_s = jnp.sum(swm[None] * s, axis=2)

    cm_t = kp["cm"] * ODE_UNFOLDS
    gleak, vleak = kp["gleak"], kp["vleak"]
    v = jnp.broadcast_to(state, (B, U)).astype(jnp.float32)
    for _ in range(ODE_UNFOLDS):
        sr = jax.nn.sigmoid(kp["r_sigma"][None] * (v[:, :, None] - kp["r_mu"][None]))
        w_num = jnp.sum(kp["r_we"][None] * sr, axis=1) + w_num_s
        w_den = jnp.sum(kp["r_wm"][None] * sr, axis=1) + w_den_s
        v = (cm_t * v + gleak * vleak + w_num) / (cm_t + gleak + w_den + EPSILON)
    motor = v[:, :MOTOR] * kp["output_w"] + kp["output_b"]
    return motor, v


if __name__ == "__main__":
    key = jax.random.PRNGKey(0)
    kx, _ = jax.random.split(key)

    # Small stand-in for Florence-2 `last_hidden_state`: (batch, seq, hidden)
    B, T, H = 2, 7, 128
    S = T * H                                 # LTC input_dim (519936 in the real model)
    # TODO(synk): Florence-2 encoder (AutoModelForCausalLM) has no Pallas
    # equivalent; last_hidden_state is emulated deterministically here.
    last_hidden_state = jax.random.normal(kx, (B, T, H), jnp.float32)
    current_state = jnp.zeros((1, UNITS), jnp.float32)    # NCPModel initial state

    tile_s, ncores = 256, 2                   # small test tiles; real S uses tile_s=2048
    params = init_params(jax.random.PRNGKey(22222), S, UNITS)
    kparams = prepare_params(params, pad_multiple=tile_s * ncores)

    x = last_hidden_state.reshape(B, -1)      # flattened_output
    motor, next_state = ltc_cell_pallas(x, current_state, kparams,
                                        tile_s=tile_s, ncores=ncores)
    jax.block_until_ready((motor, next_state))

    motor_ref, next_ref = ltc_cell_ref(x, current_state, kparams)
    assert motor.shape == (B, MOTOR) and next_state.shape == (B, UNITS)
    assert np.allclose(np.asarray(motor), np.asarray(motor_ref), rtol=1e-3, atol=1e-4)
    assert np.allclose(np.asarray(next_state), np.asarray(next_ref), rtol=1e-3, atol=1e-4)
    print("KERNEL_OK")
</pallas_src>

<mosaic_0001>
module attributes {stable_mosaic.version = 11 : i64} {
  func.func @_sensory_kernel(%arg0: i32, %arg1: i32, %arg2: memref<2x256xf32, #tpu.memory_space<vmem>>, %arg3: memref<34x256xbf16, #tpu.memory_space<vmem>>, %arg4: memref<34x256xbf16, #tpu.memory_space<vmem>>, %arg5: memref<34x256xbf16, #tpu.memory_space<vmem>>, %arg6: memref<34x256xbf16, #tpu.memory_space<vmem>>, %arg7: memref<1x2x34x128xf32, #tpu.memory_space<vmem>>, %arg8: memref<1x2x34x128xf32, #tpu.memory_space<vmem>>) attributes {dimension_semantics = [#tpu.dimension_semantics<parallel>, #tpu.dimension_semantics<arbitrary>], iteration_bounds = array<i64: 2, 2>, scalar_prefetch = 0 : i64, scratch_operands = 0 : i64, tpu.core_type = #tpu.core_type<tc>, window_params = [{transform_indices = @transform_0, window_bounds = array<i64: 2, 256>}, {transform_indices = @transform_1, window_bounds = array<i64: 34, 256>}, {transform_indices = @transform_2, window_bounds = array<i64: 34, 256>}, {transform_indices = @transform_3, window_bounds = array<i64: 34, 256>}, {transform_indices = @transform_4, window_bounds = array<i64: 34, 256>}, {transform_indices = @transform_5, window_bounds = array<i64: 1, 2, 34, 128>}, {transform_indices = @transform_6, window_bounds = array<i64: 1, 2, 34, 128>}]} {
    %c0_i32 = arith.constant 0 : i32
    %0 = arith.cmpi eq, %arg1, %c0_i32 : i32
    %1 = arith.extui %0 : i1 to i32
    %c0_i32_0 = arith.constant 0 : i32
    %2 = arith.cmpi ne, %1, %c0_i32_0 : i32
    scf.if %2 {
      %cst_36 = arith.constant 0.000000e+00 : f32
      %69 = vector.broadcast %cst_36 : f32 to vector<1x2x34x128xf32>
      %c0_37 = arith.constant 0 : index
      %c0_38 = arith.constant 0 : index
      %c0_39 = arith.constant 0 : index
      %c0_40 = arith.constant 0 : index
      %70 = vector.load %arg7[%c0_37, %c0_38, %c0_39, %c0_40] : memref<1x2x34x128xf32, #tpu.memory_space<vmem>>, vector<1x2x34x128xf32>
      tpu.vector_store %arg7[%c0_37, %c0_38, %c0_39, %c0_40], %69 {strides = array<i32>} : memref<1x2x34x128xf32, #tpu.memory_space<vmem>>, vector<1x2x34x128xf32>,
      %cst_41 = arith.constant 0.000000e+00 : f32
      %71 = vector.broadcast %cst_41 : f32 to vector<1x2x34x128xf32>
      %c0_42 = arith.constant 0 : index
      %c0_43 = arith.constant 0 : index
      %c0_44 = arith.constant 0 : index
      %c0_45 = arith.constant 0 : index
      %72 = vector.load %arg8[%c0_42, %c0_43, %c0_44, %c0_45] : memref<1x2x34x128xf32, #tpu.memory_space<vmem>>, vector<1x2x34x128xf32>
      tpu.vector_store %arg8[%c0_42, %c0_43, %c0_44, %c0_45], %71 {strides = array<i32>} : memref<1x2x34x128xf32, #tpu.memory_space<vmem>>, vector<1x2x34x128xf32>,
    } else {
    }
    %c0 = arith.constant 0 : index
    %c0_1 = arith.constant 0 : index
    %3 = vector.load %arg2[%c0, %c0_1] : memref<2x256xf32, #tpu.memory_space<vmem>>, vector<2x128xf32>
    %c0_2 = arith.constant 0 : index
    %c0_3 = arith.constant 0 : index
    %4 = vector.load %arg3[%c0_2, %c0_3] : memref<34x256xbf16, #tpu.memory_space<vmem>>, vector<34x128xbf16>
    %5 = arith.extf %4 : vector<34x128xbf16> to vector<34x128xf32>
    %c0_4 = arith.constant 0 : index
    %c0_5 = arith.constant 0 : index
    %6 = vector.load %arg4[%c0_4, %c0_5] : memref<34x256xbf16, #tpu.memory_space<vmem>>, vector<34x128xbf16>
    %7 = arith.extf %6 : vector<34x128xbf16> to vector<34x128xf32>
    %c0_6 = arith.constant 0 : index
    %c0_7 = arith.constant 0 : index
    %8 = vector.load %arg5[%c0_6, %c0_7] : memref<34x256xbf16, #tpu.memory_space<vmem>>, vector<34x128xbf16>
    %9 = arith.extf %8 : vector<34x128xbf16> to vector<34x128xf32>
    %c0_8 = arith.constant 0 : index
    %c0_9 = arith.constant 0 : index
    %10 = vector.load %arg6[%c0_8, %c0_9] : memref<34x256xbf16, #tpu.memory_space<vmem>>, vector<34x128xbf16>
    %11 = arith.extf %10 : vector<34x128xbf16> to vector<34x128xf32>
    %12 = vector.shape_cast %7 : vector<34x128xf32> to vector<1x34x128xf32>
    %13 = vector.shape_cast %3 : vector<2x128xf32> to vector<2x1x128xf32>
    %14 = vector.shape_cast %5 : vector<34x128xf32> to vector<1x34x128xf32>
    %15 = vector.broadcast %13 : vector<2x1x128xf32> to vector<2x34x128xf32>
    %16 = vector.broadcast %14 : vector<1x34x128xf32> to vector<2x34x128xf32>
    %17 = arith.subf %15, %16 : vector<2x34x128xf32>
    %18 = vector.broadcast %12 : vector<1x34x128xf32> to vector<2x34x128xf32>
    %19 = arith.mulf %18, %17 : vector<2x34x128xf32>
    %20 = arith.negf %19 : vector<2x34x128xf32>
    %21 = math.exp %20 : vector<2x34x128xf32>
    %cst = arith.constant 1.000000e+00 : f32
    %22 = vector.broadcast %cst : f32 to vector<2x34x128xf32>
    %23 = arith.addf %22, %21 : vector<2x34x128xf32>
    %24 = arith.divf %22, %23 : vector<2x34x128xf32>
    %25 = vector.shape_cast %11 : vector<34x128xf32> to vector<1x34x128xf32>
    %26 = vector.broadcast %25 : vector<1x34x128xf32> to vector<2x34x128xf32>
    %27 = arith.mulf %26, %24 : vector<2x34x128xf32>
    %28 = vector.shape_cast %9 : vector<34x128xf32> to vector<1x34x128xf32>
    %29 = vector.broadcast %28 : vector<1x34x128xf32> to vector<2x34x128xf32>
    %30 = arith.mulf %29, %24 : vector<2x34x128xf32>
    %c0_10 = arith.constant 0 : index
    %c128 = arith.constant 128 : index
    %31 = vector.load %arg2[%c0_10, %c128] : memref<2x256xf32, #tpu.memory_space<vmem>>, vector<2x128xf32>
    %c0_11 = arith.constant 0 : index
    %c128_12 = arith.constant 128 : index
    %32 = vector.load %arg3[%c0_11, %c128_12] : memref<34x256xbf16, #tpu.memory_space<vmem>>, vector<34x128xbf16>
    %33 = arith.extf %32 : vector<34x128xbf16> to vector<34x128xf32>
    %c0_13 = arith.constant 0 : index
    %c128_14 = arith.constant 128 : index
    %34 = vector.load %arg4[%c0_13, %c128_14] : memref<34x256xbf16, #tpu.memory_space<vmem>>, vector<34x128xbf16>
    %35 = arith.extf %34 : vector<34x128xbf16> to vector<34x128xf32>
    %c0_15 = arith.constant 0 : index
    %c128_16 = arith.constant 128 : index
    %36 = vector.load %arg5[%c0_15, %c128_16] : memref<34x256xbf16, #tpu.memory_space<vmem>>, vector<34x128xbf16>
    %37 = arith.extf %36 : vector<34x128xbf16> to vector<34x128xf32>
    %c0_17 = arith.constant 0 : index
    %c128_18 = arith.constant 128 : index
    %38 = vector.load %arg6[%c0_17, %c128_18] : memref<34x256xbf16, #tpu.memory_space<vmem>>, vector<34x128xbf16>
    %39 = arith.extf %38 : vector<34x128xbf16> to vector<34x128xf32>
    %40 = vector.shape_cast %35 : vector<34x128xf32> to vector<1x34x128xf32>
    %41 = vector.shape_cast %31 : vector<2x128xf32> to vector<2x1x128xf32>
    %42 = vector.shape_cast %33 : vector<34x128xf32> to vector<1x34x128xf32>
    %43 = vector.broadcast %41 : vector<2x1x128xf32> to vector<2x34x128xf32>
    %44 = vector.broadcast %42 : vector<1x34x128xf32> to vector<2x34x128xf32>
    %45 = arith.subf %43, %44 : vector<2x34x128xf32>
    %46 = vector.broadcast %40 : vector<1x34x128xf32> to vector<2x34x128xf32>
    %47 = arith.mulf %46, %45 : vector<2x34x128xf32>
    %48 = arith.negf %47 : vector<2x34x128xf32>
    %49 = math.exp %48 : vector<2x34x128xf32>
    %cst_19 = arith.constant 1.000000e+00 : f32
    %50 = vector.broadcast %cst_19 : f32 to vector<2x34x128xf32>
    %51 = arith.addf %50, %49 : vector<2x34x128xf32>
    %52 = arith.divf %50, %51 : vector<2x34x128xf32>
    %53 = vector.shape_cast %39 : vector<34x128xf32> to vector<1x34x128xf32>
    %54 = vector.broadcast %53 : vector<1x34x128xf32> to vector<2x34x128xf32>
    %55 = arith.mulf %54, %52 : vector<2x34x128xf32>
    %56 = vector.shape_cast %37 : vector<34x128xf32> to vector<1x34x128xf32>
    %57 = vector.broadcast %56 : vector<1x34x128xf32> to vector<2x34x128xf32>
    %58 = arith.mulf %57, %52 : vector<2x34x128xf32>
    %59 = arith.addf %27, %55 : vector<2x34x128xf32>
    %60 = arith.addf %30, %58 : vector<2x34x128xf32>
    %c0_20 = arith.constant 0 : index
    %c0_21 = arith.constant 0 : index
    %c0_22 = arith.constant 0 : index
    %c0_23 = arith.constant 0 : index
    %61 = vector.load %arg7[%c0_20, %c0_21, %c0_22, %c0_23] : memref<1x2x34x128xf32, #tpu.memory_space<vmem>>, vector<1x2x34x128xf32>
    %62 = vector.shape_cast %59 : vector<2x34x128xf32> to vector<1x2x34x128xf32>
    %63 = arith.addf %61, %62 : vector<1x2x34x128xf32>
    %c0_24 = arith.constant 0 : index
    %c0_25 = arith.constant 0 : index
    %c0_26 = arith.constant 0 : index
    %c0_27 = arith.constant 0 : index
    %64 = vector.load %arg7[%c0_24, %c0_25, %c0_26, %c0_27] : memref<1x2x34x128xf32, #tpu.memory_space<vmem>>, vector<1x2x34x128xf32>
    tpu.vector_store %arg7[%c0_24, %c0_25, %c0_26, %c0_27], %63 {strides = array<i32>} : memref<1x2x34x128xf32, #tpu.memory_space<vmem>>, vector<1x2x34x128xf32>,
    %c0_28 = arith.constant 0 : index
    %c0_29 = arith.constant 0 : index
    %c0_30 = arith.constant 0 : index
    %c0_31 = arith.constant 0 : index
    %65 = vector.load %arg8[%c0_28, %c0_29, %c0_30, %c0_31] : memref<1x2x34x128xf32, #tpu.memory_space<vmem>>, vector<1x2x34x128xf32>
    %66 = vector.shape_cast %60 : vector<2x34x128xf32> to vector<1x2x34x128xf32>
    %67 = arith.addf %65, %66 : vector<1x2x34x128xf32>
    %c0_32 = arith.constant 0 : index
    %c0_33 = arith.constant 0 : index
    %c0_34 = arith.constant 0 : index
    %c0_35 = arith.constant 0 : index
    %68 = vector.load %arg8[%c0_32, %c0_33, %c0_34, %c0_35] : memref<1x2x34x128xf32, #tpu.memory_space<vmem>>, vector<1x2x34x128xf32>
    tpu.vector_store %arg8[%c0_32, %c0_33, %c0_34, %c0_35], %67 {strides = array<i32>} : memref<1x2x34x128xf32, #tpu.memory_space<vmem>>, vector<1x2x34x128xf32>,
    return
  }
  func.func @transform_0(%arg0: i32, %arg1: i32) -> (i32, i32) {
    %c2_i32 = arith.constant 2 : i32
    %0 = arith.muli %arg0, %c2_i32 : i32
    %1 = arith.addi %0, %arg1 : i32
    %c0_i32 = arith.constant 0 : i32
    %c0_i32_0 = arith.constant 0 : i32
    return %c0_i32, %1 : i32, i32
  }
  func.func @transform_1(%arg0: i32, %arg1: i32) -> (i32, i32) {
    %c2_i32 = arith.constant 2 : i32
    %0 = arith.muli %arg0, %c2_i32 : i32
    %1 = arith.addi %0, %arg1 : i32
    %c0_i32 = arith.constant 0 : i32
    %c0_i32_0 = arith.constant 0 : i32
    return %c0_i32, %1 : i32, i32
  }
  func.func @transform_2(%arg0: i32, %arg1: i32) -> (i32, i32) {
    %c2_i32 = arith.constant 2 : i32
    %0 = arith.muli %arg0, %c2_i32 : i32
    %1 = arith.addi %0, %arg1 : i32
    %c0_i32 = arith.constant 0 : i32
    %c0_i32_0 = arith.constant 0 : i32
    return %c0_i32, %1 : i32, i32
  }
  func.func @transform_3(%arg0: i32, %arg1: i32) -> (i32, i32) {
    %c2_i32 = arith.constant 2 : i32
    %0 = arith.muli %arg0, %c2_i32 : i32
    %1 = arith.addi %0, %arg1 : i32
    %c0_i32 = arith.constant 0 : i32
    %c0_i32_0 = arith.constant 0 : i32
    return %c0_i32, %1 : i32, i32
  }
  func.func @transform_4(%arg0: i32, %arg1: i32) -> (i32, i32) {
    %c2_i32 = arith.constant 2 : i32
    %0 = arith.muli %arg0, %c2_i32 : i32
    %1 = arith.addi %0, %arg1 : i32
    %c0_i32 = arith.constant 0 : i32
    %c0_i32_0 = arith.constant 0 : i32
    return %c0_i32, %1 : i32, i32
  }
  func.func @transform_5(%arg0: i32, %arg1: i32) -> (i32, i32, i32, i32) {
    %c0_i32 = arith.constant 0 : i32
    %c0_i32_0 = arith.constant 0 : i32
    %c0_i32_1 = arith.constant 0 : i32
    %c0_i32_2 = arith.constant 0 : i32
    return %arg0, %c0_i32, %c0_i32_0, %c0_i32_1 : i32, i32, i32, i32
  }
  func.func @transform_6(%arg0: i32, %arg1: i32) -> (i32, i32, i32, i32) {
    %c0_i32 = arith.constant 0 : i32
    %c0_i32_0 = arith.constant 0 : i32
    %c0_i32_1 = arith.constant 0 : i32
    %c0_i32_2 = arith.constant 0 : i32
    return %arg0, %c0_i32, %c0_i32_0, %c0_i32_1 : i32, i32, i32, i32
  }
}

</mosaic_0001>

<llo_original>
// kernel: tpu_custom_call.1
$region0: #{tpu_custom_call.1}
  #allocation0 [shape = 'u32[]', space=smem, size = 0x4, offset = 0x4, fixed_abs, tag = 'smem constant byte address 0x4 - core index']
  #allocation1 [shape = 'u32[144,128]{1,0:T(1,128)}', space=vmem, size = 0x12000, scoped, tag = 'internal scratch']
  %s0 = inlined_call_operand.hbm [shape: f32[2,1024], index: 0, kind: input, shape index: {}]
  %s1 = inlined_call_operand.hbm [shape: bf16[34,1024], index: 1, kind: input, shape index: {}]
  %s2 = inlined_call_operand.hbm [shape: bf16[34,1024], index: 2, kind: input, shape index: {}]
  %s3 = inlined_call_operand.hbm [shape: bf16[34,1024], index: 3, kind: input, shape index: {}]
  %s4 = inlined_call_operand.hbm [shape: bf16[34,1024], index: 4, kind: input, shape index: {}]
  %s5 = inlined_call_operand.vmem [shape: f32[2,2,34,128], index: 5, kind: output, shape index: {0}]
  %s6 = inlined_call_operand.vmem [shape: f32[2,2,34,128], index: 6, kind: output, shape index: {1}]
  %7 = xla_tuple %s5, %s6
  %s8 = sld [smem:[#allocation0]]
  $region85: #{tpu_custom_call.1} parent=0
    _
  %s10 = ssub.s32 1, %s8
  %s11 = scalar_select 0, %s10, %s8
  $region1: #{tpu_custom_call.1} parent=0
    #allocation2 [shape = 'u8[4096]{0}', space=vmem, size = 0x1000, scoped, tag = 'input window, operand 0']
    #allocation3 [shape = 's32[2]{0}', space=sflag, size = 0x8, scoped, tag = 'scoped memory for tpu_custom_call.1']
    #allocation4 [shape = 'u8[40960]{0}', space=vmem, size = 0xa000, scoped, tag = 'input window, operand 1']
    #allocation5 [shape = 's32[2]{0}', space=sflag, size = 0x8, scoped, tag = 'scoped memory for tpu_custom_call.1']
    #allocation6 [shape = 'u8[40960]{0}', space=vmem, size = 0xa000, scoped, tag = 'input window, operand 2']
    #allocation7 [shape = 'u8[40960]{0}', space=vmem, size = 0xa000, scoped, tag = 'input window, operand 3']
    #allocation8 [shape = 's32[2]{0}', space=sflag, size = 0x8, scoped, tag = 'scoped memory for tpu_custom_call.1']
    #allocation9 [shape = 'u8[40960]{0}', space=vmem, size = 0xa000, scoped, tag = 'input window, operand 4']
    %12 = vsyncpa [#allocation3], 0
    %s13 = scalar_lea.sflag [#allocation3], 1
    %14 = vsyncpa %s13, 0
    %15 = vsyncpa [#allocation5], 0
    %s16 = scalar_lea.sflag [#allocation5], 1
    %17 = vsyncpa %s16, 0
    %18 = vsyncpa [#allocation8], 0
    %s19 = scalar_lea.sflag [#allocation8], 1
    %20 = vsyncpa %s19, 0
    loop: start=0, step=1, limit=6
    $region2: #{tpu_custom_call.1} parent=1 // loop_pre_header
      _
    $region3: #{tpu_custom_call.1} parent=1 // loop_header
      %s22 = sphi 0, %s26
      %p23 = scmp.ge.s32.totalorder %s22, 6
      %s29 = sphi 0, %s41
      %s30 = sphi 0, %s37
      %s31 = sphi 0, %s29
      %s32 = sphi 0, %s30
      %s33 = sphi 0, %s31
      %s34 = sphi 0, %s32
      %s48 = sphi 0, %s50
      %s51 = sphi 0, %s48
      %s52 = sphi 0, %s51
      %s68 = sphi 0, %s52
      %s78 = sphi 0, %s80
      %s81 = sphi 0, %s78
      %s82 = sphi 0, %s81
      %s98 = sphi 0, %s82
      %s108 = sphi 0, %s110
      %s111 = sphi 0, %s108
      %s112 = sphi 0, %s111
      %s128 = sphi 0, %s112
      %s138 = sphi 0, %s140
      %s141 = sphi 0, %s138
      %s142 = sphi 0, %s141
      %s158 = sphi 0, %s142
      %s168 = sphi 0, %s170
      %s171 = sphi 0, %s168
      %s172 = sphi 0, %s171
      %s188 = sphi 0, %s172
      %s194 = sphi 0, %s196
      %s197 = sphi 0, %s194
      %s198 = sphi 0, %s197
      %s214 = sphi 0, %s198
      %s220 = sphi 0, %s222
      %s223 = sphi 0, %s220
      %s224 = sphi 0, %s223
      %s240 = sphi 0, %s224
    $region4: #{tpu_custom_call.1} parent=1 // loop_header_branch
      %25 = sbr.rel (%p23) target = $region8
    $region5: #{tpu_custom_call.1} parent=1 // loop_body
      %s27 = ssub.s32 %s22, 1
      %s28 = ssub.s32 %s22, 2
      %s35 = sadd.s32 1, %s30
      %p36 = scmp.ge.s32.totalorder %s35, 2
      %s37 = scalar_select %p36, 0, %s35
      %s38 = sadd.s32 1, %s29
      %s39 = scalar_select %p36, %s38, %s29
      %p40 = scmp.ge.s32.totalorder %s39, 2
      %s41 = scalar_select %p40, 0, %s39
      %s42 = smul.u32 %s29, 2
      %s43 = sadd.s32 %s42, %s30
      %s44 = smul.u32 %s41, 2
      %s45 = sadd.s32 %s44, %s37
      %s46 = ssub.s32 %s43, %s45
      %p47 = scmp.eq.s32.totalorder %s46, 0
      %s49 = sadd.s32 %s48, 1
      %s50 = scalar_select %p47, %s48, %s49
      %p53 = pneg %p47
      %p54 = scmp.eq.s32.totalorder %s22, 3
      %p55 = por %p53, %p54
      %p56 = scmp.ne.s32.totalorder %s48, %s51
      %p57 = scmp.eq.s32.totalorder %s22, 0
      %p58 = por %p56, %p57
      %p59 = scmp.ne.s32.totalorder %s48, %s51
      %p60 = scmp.eq.s32.totalorder %s27, 3
      %p61 = por %p59, %p60
      %p62 = scmp.ne.s32.totalorder %s51, %s52
      %p63 = scmp.eq.s32.totalorder %s27, 0
      %p64 = por %p62, %p63
      %p65 = scmp.ne.s32.totalorder %s51, %s52
      %p66 = scmp.eq.s32.totalorder %s28, 3
      %p67 = por %p65, %p66
      %p69 = scmp.ne.s32.totalorder %s52, %s68
      %p70 = scmp.eq.s32.totalorder %s28, 0
      %p71 = por %p69, %p70
      %s72 = smul.u32 %s29, 2
      %s73 = sadd.s32 %s72, %s30
      %s74 = smul.u32 %s41, 2
      %s75 = sadd.s32 %s74, %s37
      %s76 = ssub.s32 %s73, %s75
      %p77 = scmp.eq.s32.totalorder %s76, 0
      %s79 = sadd.s32 %s78, 1
      %s80 = scalar_select %p77, %s78, %s79
      %p83 = pneg %p77
      %p84 = scmp.eq.s32.totalorder %s22, 3
      %p85 = por %p83, %p84
      %p86 = scmp.ne.s32.totalorder %s78, %s81
      %p87 = scmp.eq.s32.totalorder %s22, 0
      %p88 = por %p86, %p87
      %p89 = scmp.ne.s32.totalorder %s78, %s81
      %p90 = scmp.eq.s32.totalorder %s27, 3
      %p91 = por %p89, %p90
      %p92 = scmp.ne.s32.totalorder %s81, %s82
      %p93 = scmp.eq.s32.totalorder %s27, 0
      %p94 = por %p92, %p93
      %p95 = scmp.ne.s32.totalorder %s81, %s82
      %p96 = scmp.eq.s32.totalorder %s28, 3
      %p97 = por %p95, %p96
      %p99 = scmp.ne.s32.totalorder %s82, %s98
      %p100 = scmp.eq.s32.totalorder %s28, 0
      %p101 = por %p99, %p100
      %s102 = smul.u32 %s29, 2
      %s103 = sadd.s32 %s102, %s30
      %s104 = smul.u32 %s41, 2
      %s105 = sadd.s32 %s104, %s37
      %s106 = ssub.s32 %s103, %s105
      %p107 = scmp.eq.s32.totalorder %s106, 0
      %s109 = sadd.s32 %s108, 1
      %s110 = scalar_select %p107, %s108, %s109
      %p113 = pneg %p107
      %p114 = scmp.eq.s32.totalorder %s22, 3
      %p115 = por %p113, %p114
      %p116 = scmp.ne.s32.totalorder %s108, %s111
      %p117 = scmp.eq.s32.totalorder %s22, 0
      %p118 = por %p116, %p117
      %p119 = scmp.ne.s32.totalorder %s108, %s111
      %p120 = scmp.eq.s32.totalorder %s27, 3
      %p121 = por %p119, %p120
      %p122 = scmp.ne.s32.totalorder %s111, %s112
      %p123 = scmp.eq.s32.totalorder %s27, 0
      %p124 = por %p122, %p123
      %p125 = scmp.ne.s32.totalorder %s111, %s112
      %p126 = scmp.eq.s32.totalorder %s28, 3
      %p127 = por %p125, %p126
      %p129 = scmp.ne.s32.totalorder %s112, %s128
      %p130 = scmp.eq.s32.totalorder %s28, 0
      %p131 = por %p129, %p130
      %s132 = smul.u32 %s29, 2
      %s133 = sadd.s32 %s132, %s30
      %s134 = smul.u32 %s41, 2
      %s135 = sadd.s32 %s134, %s37
      %s136 = ssub.s32 %s133, %s135
      %p137 = scmp.eq.s32.totalorder %s136, 0
      %s139 = sadd.s32 %s138, 1
      %s140 = scalar_select %p137, %s138, %s139
      %p143 = pneg %p137
      %p144 = scmp.eq.s32.totalorder %s22, 3
      %p145 = por %p143, %p144
      %p146 = scmp.ne.s32.totalorder %s138, %s141
      %p147 = scmp.eq.s32.totalorder %s22, 0
      %p148 = por %p146, %p147
      %p149 = scmp.ne.s32.totalorder %s138, %s141
      %p150 = scmp.eq.s32.totalorder %s27, 3
      %p151 = por %p149, %p150
      %p152 = scmp.ne.s32.totalorder %s141, %s142
      %p153 = scmp.eq.s32.totalorder %s27, 0
      %p154 = por %p152, %p153
      %p155 = scmp.ne.s32.totalorder %s141, %s142
      %p156 = scmp.eq.s32.totalorder %s28, 3
      %p157 = por %p155, %p156
      %p159 = scmp.ne.s32.totalorder %s142, %s158
      %p160 = scmp.eq.s32.totalorder %s28, 0
      %p161 = por %p159, %p160
      %s162 = smul.u32 %s29, 2
      %s163 = sadd.s32 %s162, %s30
      %s164 = smul.u32 %s41, 2
      %s165 = sadd.s32 %s164, %s37
      %s166 = ssub.s32 %s163, %s165
      %p167 = scmp.eq.s32.totalorder %s166, 0
      %s169 = sadd.s32 %s168, 1
      %s170 = scalar_select %p167, %s168, %s169
      %p173 = pneg %p167
      %p174 = scmp.eq.s32.totalorder %s22, 3
      %p175 = por %p173, %p174
      %p176 = scmp.ne.s32.totalorder %s168, %s171
      %p177 = scmp.eq.s32.totalorder %s22, 0
      %p178 = por %p176, %p177
      %p179 = scmp.ne.s32.totalorder %s168, %s171
      %p180 = scmp.eq.s32.totalorder %s27, 3
      %p181 = por %p179, %p180
      %p182 = scmp.ne.s32.totalorder %s171, %s172
      %p183 = scmp.eq.s32.totalorder %s27, 0
      %p184 = por %p182, %p183
      %p185 = scmp.ne.s32.totalorder %s171, %s172
      %p186 = scmp.eq.s32.totalorder %s28, 3
      %p187 = por %p185, %p186
      %p189 = scmp.ne.s32.totalorder %s172, %s188
      %p190 = scmp.eq.s32.totalorder %s28, 0
      %p191 = por %p189, %p190
      %s192 = ssub.s32 %s29, %s41
      %p193 = scmp.eq.s32.totalorder %s192, 0
      %s195 = sadd.s32 %s194, 1
      %s196 = scalar_select %p193, %s194, %s195
      %p199 = pneg %p193
      %p200 = scmp.eq.s32.totalorder %s22, 3
      %p201 = por %p199, %p200
      %p202 = scmp.ne.s32.totalorder %s194, %s197
      %p203 = scmp.eq.s32.totalorder %s22, 0
      %p204 = por %p202, %p203
      %p205 = scmp.ne.s32.totalorder %s194, %s197
      %p206 = scmp.eq.s32.totalorder %s27, 3
      %p207 = por %p205, %p206
      %p208 = scmp.ne.s32.totalorder %s197, %s198
      %p209 = scmp.eq.s32.totalorder %s27, 0
      %p210 = por %p208, %p209
      %p211 = scmp.ne.s32.totalorder %s197, %s198
      %p212 = scmp.eq.s32.totalorder %s28, 3
      %p213 = por %p211, %p212
      %p215 = scmp.ne.s32.totalorder %s198, %s214
      %p216 = scmp.eq.s32.totalorder %s28, 0
      %p217 = por %p215, %p216
      %s218 = ssub.s32 %s29, %s41
      %p219 = scmp.eq.s32.totalorder %s218, 0
      %s221 = sadd.s32 %s220, 1
      %s222 = scalar_select %p219, %s220, %s221
      %p225 = pneg %p219
      %p226 = scmp.eq.s32.totalorder %s22, 3
      %p227 = por %p225, %p226
      %p228 = scmp.ne.s32.totalorder %s220, %s223
      %p229 = scmp.eq.s32.totalorder %s22, 0
      %p230 = por %p228, %p229
      %p231 = scmp.ne.s32.totalorder %s220, %s223
      %p232 = scmp.eq.s32.totalorder %s27, 3
      %p233 = por %p231, %p232
      %p234 = scmp.ne.s32.totalorder %s223, %s224
      %p235 = scmp.eq.s32.totalorder %s27, 0
      %p236 = por %p234, %p235
      %p237 = scmp.ne.s32.totalorder %s223, %s224
      %p238 = scmp.eq.s32.totalorder %s28, 3
      %p239 = por %p237, %p238
      %p241 = scmp.ne.s32.totalorder %s224, %s240
      %p242 = scmp.eq.s32.totalorder %s28, 0
      %p243 = por %p241, %p242
      %p244 = scmp.le.s32.totalorder 1, %s22
      %p245 = scmp.lt.s32.totalorder %s22, 5
      %p246 = pnand %p244, %p245
      %p247 = pneg %p246
      // Predicated region
      $region9: #{tpu_custom_call.1} parent=5 // pred_check
        _
      $region10: #{tpu_custom_call.1} parent=5 // pred_check_branch
        %249 = sbr.rel (%p246) target = $region12
      $region11: #{tpu_custom_call.1} parent=5 // pred_region
        %s250 = ssub.s32 %s22, 1
      $region12: #{tpu_custom_call.1} parent=5 // pred_fallthru
        _
      %p251 = scmp.lt.s32.totalorder %s22, 4
      // Predicated region
      $region13: #{tpu_custom_call.1} parent=5 // pred_check
        %p252 = pneg %p251
      $region14: #{tpu_custom_call.1} parent=5 // pred_check_branch
        %254 = sbr.rel (%p252) target = $region16
      $region15: #{tpu_custom_call.1} parent=5 // pred_region
        // Predicated region
        $region17: #{tpu_custom_call.1} parent=15 // pred_check
          %p255 = pneg %p58
        $region18: #{tpu_custom_call.1} parent=15 // pred_check_branch
          %257 = sbr.rel (%p255) target = $region20
        $region19: #{tpu_custom_call.1} parent=15 // pred_region
          %s258 = sand.u32 %s48, 1
          %s259 = scalar_lea.sflag [#allocation3], %s258
          %s260 = sand.u32 %s48, 1
          %s261 = smul.addr %s260, 4
          %s262 = scalar_lea.vmem [#allocation2], %s261
          %s263 = smul.u32 %s29, 2
          %s264 = sadd.s32 %s263, %s30
          %s265 = smul.u32 2, %s264
          %s267 = ssub.s32 64, 64
          %268 = vsyncadd %s259, %s267
          %s269 = smul.addr %s265, 32
          %s270 = scalar_lea.hbm %s0, %s269
          %s272 = sshll.u32 %s262, 4
          %s273 = int_to_ptr.vmem [resolvable:$true] %s272
          %275 = dma.hbm_to_vmem [thread:$0]  %s270, 64, %s273, %s259
        $region20: #{tpu_custom_call.1} parent=15 // pred_fallthru
          _
        // Predicated region
        $region21: #{tpu_custom_call.1} parent=15 // pred_check
          %p276 = pneg %p88
        $region22: #{tpu_custom_call.1} parent=15 // pred_check_branch
          %278 = sbr.rel (%p276) target = $region24
        $region23: #{tpu_custom_call.1} parent=15 // pred_region
          %s279 = sand.u32 %s22, 1
          %s280 = scalar_lea.sflag [#allocation5], %s279
          %s281 = sand.u32 %s78, 1
          %s282 = smul.addr %s281, 40
          %s283 = scalar_lea.vmem [#allocation4], %s282
          %s284 = smul.u32 %s29, 2
          %s285 = sadd.s32 %s284, %s30
          %s286 = smul.u32 2, %s285
          %s288 = ssub.s32 640, 640
          %289 = vsyncadd %s280, %s288
          %s290 = smul.addr %s286, 64
          %s291 = scalar_lea.hbm %s1, %s290
          %s292 = sshll.u32 %s283, 4
          %s293 = int_to_ptr.vmem [resolvable:$true] %s292
          %298 = dma.hbm_to_vmem [thread:$0]  %s291, 640, %s293, %s280, 512, 128, 8
        $region24: #{tpu_custom_call.1} parent=15 // pred_fallthru
          _
        // Predicated region
        $region25: #{tpu_custom_call.1} parent=15 // pred_check
          %p299 = pneg %p118
        $region26: #{tpu_custom_call.1} parent=15 // pred_check_branch
          %301 = sbr.rel (%p299) target = $region28
        $region27: #{tpu_custom_call.1} parent=15 // pred_region
          %s302 = sand.u32 %s22, 1
          %s303 = scalar_lea.sflag [#allocation5], %s302
          %s304 = sand.u32 %s108, 1
          %s305 = smul.addr %s304, 40
          %s306 = scalar_lea.vmem [#allocation6], %s305
          %s307 = smul.u32 %s29, 2
          %s308 = sadd.s32 %s307, %s30
          %s309 = smul.u32 2, %s308
          %s311 = ssub.s32 640, 640
          %312 = vsyncadd %s303, %s311
          %s313 = smul.addr %s309, 64
          %s314 = scalar_lea.hbm %s2, %s313
          %s315 = sshll.u32 %s306, 4
          %s316 = int_to_ptr.vmem [resolvable:$true] %s315
          %321 = dma.hbm_to_vmem [thread:$0]  %s314, 640, %s316, %s303, 512, 128, 8
        $region28: #{tpu_custom_call.1} parent=15 // pred_fallthru
          _
        // Predicated region
        $region29: #{tpu_custom_call.1} parent=15 // pred_check
          %p322 = pneg %p148
        $region30: #{tpu_custom_call.1} parent=15 // pred_check_branch
          %324 = sbr.rel (%p322) target = $region32
        $region31: #{tpu_custom_call.1} parent=15 // pred_region
          %s325 = sand.u32 %s22, 1
          %s326 = scalar_lea.sflag [#allocation8], %s325
          %s327 = sand.u32 %s138, 1
          %s328 = smul.addr %s327, 40
          %s329 = scalar_lea.vmem [#allocation7], %s328
          %s330 = smul.u32 %s29, 2
          %s331 = sadd.s32 %s330, %s30
          %s332 = smul.u32 2, %s331
          %s334 = ssub.s32 640, 640
          %335 = vsyncadd %s326, %s334
          %s336 = smul.addr %s332, 64
          %s337 = scalar_lea.hbm %s3, %s336
          %s338 = sshll.u32 %s329, 4
          %s339 = int_to_ptr.vmem [resolvable:$true] %s338
          %344 = dma.hbm_to_vmem [thread:$0]  %s337, 640, %s339, %s326, 512, 128, 8
        $region32: #{tpu_custom_call.1} parent=15 // pred_fallthru
          _
        // Predicated region
        $region33: #{tpu_custom_call.1} parent=15 // pred_check
          %p345 = pneg %p178
        $region34: #{tpu_custom_call.1} parent=15 // pred_check_branch
          %347 = sbr.rel (%p345) target = $region36
        $region35: #{tpu_custom_call.1} parent=15 // pred_region
          %s348 = sand.u32 %s22, 1
          %s349 = scalar_lea.sflag [#allocation8], %s348
          %s350 = sand.u32 %s168, 1
          %s351 = smul.addr %s350, 40
          %s352 = scalar_lea.vmem [#allocation9], %s351
          %s353 = smul.u32 %s29, 2
          %s354 = sadd.s32 %s353, %s30
          %s355 = smul.u32 2, %s354
          %s357 = ssub.s32 640, 640
          %358 = vsyncadd %s349, %s357
          %s359 = smul.addr %s355, 64
          %s360 = scalar_lea.hbm %s4, %s359
          %s361 = sshll.u32 %s352, 4
          %s362 = int_to_ptr.vmem [resolvable:$true] %s361
          %367 = dma.hbm_to_vmem [thread:$0]  %s360, 640, %s362, %s349, 512, 128, 8
        $region36: #{tpu_custom_call.1} parent=15 // pred_fallthru
          _
      $region16: #{tpu_custom_call.1} parent=5 // pred_fallthru
        _
      %p368 = scmp.le.s32.totalorder 1, %s22
      %p369 = scmp.lt.s32.totalorder %s22, 5
      %p370 = pnand %p368, %p369
      %p371 = pneg %p370
      // Predicated region
      $region37: #{tpu_custom_call.1} parent=5 // pred_check
        _
      $region38: #{tpu_custom_call.1} parent=5 // pred_check_branch
        %373 = sbr.rel (%p370) target = $region40
      $region39: #{tpu_custom_call.1} parent=5 // pred_region
        %s374 = ssub.s32 %s22, 1
        %s375 = sand.u32 %s51, 1
        %s376 = scalar_lea.sflag [#allocation3], %s375
        %s377 = sand.u32 %s51, 1
        %s378 = smul.addr %s377, 4
        %s379 = scalar_lea.vmem [#allocation2], %s378
        // Predicated region
        $region41: #{tpu_custom_call.1} parent=39 // pred_check
          %p380 = pneg %p64
        $region42: #{tpu_custom_call.1} parent=39 // pred_check_branch
          %382 = sbr.rel (%p380) target = $region44
        $region43: #{tpu_custom_call.1} parent=39 // pred_region
          %383 = dma.done %s376, 64
        $region44: #{tpu_custom_call.1} parent=39 // pred_fallthru
          _
        %s384 = sand.u32 %s27, 1
        %s385 = scalar_lea.sflag [#allocation5], %s384
        %s386 = sand.u32 %s81, 1
        %s387 = smul.addr %s386, 40
        %s388 = scalar_lea.vmem [#allocation4], %s387
        // Predicated region
        $region45: #{tpu_custom_call.1} parent=39 // pred_check
          %p389 = pneg %p94
        $region46: #{tpu_custom_call.1} parent=39 // pred_check_branch
          %391 = sbr.rel (%p389) target = $region48
        $region47: #{tpu_custom_call.1} parent=39 // pred_region
          %392 = dma.done %s385, 640
        $region48: #{tpu_custom_call.1} parent=39 // pred_fallthru
          _
        %s393 = sand.u32 %s27, 1
        %s394 = scalar_lea.sflag [#allocation5], %s393
        %s395 = sand.u32 %s111, 1
        %s396 = smul.addr %s395, 40
        %s397 = scalar_lea.vmem [#allocation6], %s396
        // Predicated region
        $region49: #{tpu_custom_call.1} parent=39 // pred_check
          %p398 = pneg %p124
        $region50: #{tpu_custom_call.1} parent=39 // pred_check_branch
          %400 = sbr.rel (%p398) target = $region52
        $region51: #{tpu_custom_call.1} parent=39 // pred_region
          %401 = dma.done %s394, 640
        $region52: #{tpu_custom_call.1} parent=39 // pred_fallthru
          _
        %s402 = sand.u32 %s27, 1
        %s403 = scalar_lea.sflag [#allocation8], %s402
        %s404 = sand.u32 %s141, 1
        %s405 = smul.addr %s404, 40
        %s406 = scalar_lea.vmem [#allocation7], %s405
        // Predicated region
        $region53: #{tpu_custom_call.1} parent=39 // pred_check
          %p407 = pneg %p154
        $region54: #{tpu_custom_call.1} parent=39 // pred_check_branch
          %409 = sbr.rel (%p407) target = $region56
        $region55: #{tpu_custom_call.1} parent=39 // pred_region
          %410 = dma.done %s403, 640
        $region56: #{tpu_custom_call.1} parent=39 // pred_fallthru
          _
        %s411 = sand.u32 %s27, 1
        %s412 = scalar_lea.sflag [#allocation8], %s411
        %s413 = sand.u32 %s171, 1
        %s414 = smul.addr %s413, 40
        %s415 = scalar_lea.vmem [#allocation9], %s414
        // Predicated region
        $region57: #{tpu_custom_call.1} parent=39 // pred_check
          %p416 = pneg %p184
        $region58: #{tpu_custom_call.1} parent=39 // pred_check_branch
          %418 = sbr.rel (%p416) target = $region60
        $region59: #{tpu_custom_call.1} parent=39 // pred_region
          %419 = dma.done %s412, 640
        $region60: #{tpu_custom_call.1} parent=39 // pred_fallthru
          _
        %s420 = sand.u32 %s51, 1
        %s421 = scalar_lea.sflag [#allocation3], %s420
        %s422 = sand.u32 %s51, 1
        %s423 = smul.addr %s422, 4
        %s424 = scalar_lea.vmem [#allocation2], %s423
        %p425 = pneg %p64
        %p426 = pneg %p61
        %s427 = sand.u32 %s27, 1
        %s428 = scalar_lea.sflag [#allocation5], %s427
        %s429 = sand.u32 %s81, 1
        %s430 = smul.addr %s429, 40
        %s431 = scalar_lea.vmem [#allocation4], %s430
        %p432 = pneg %p94
        %p433 = pneg %p91
        %s434 = sand.u32 %s27, 1
        %s435 = scalar_lea.sflag [#allocation5], %s434
        %s436 = sand.u32 %s111, 1
        %s437 = smul.addr %s436, 40
        %s438 = scalar_lea.vmem [#allocation6], %s437
        %p439 = pneg %p124
        %p440 = pneg %p121
        %s441 = sand.u32 %s27, 1
        %s442 = scalar_lea.sflag [#allocation8], %s441
        %s443 = sand.u32 %s141, 1
        %s444 = smul.addr %s443, 40
        %s445 = scalar_lea.vmem [#allocation7], %s444
        %p446 = pneg %p154
        %p447 = pneg %p151
        %s448 = sand.u32 %s27, 1
        %s449 = scalar_lea.sflag [#allocation8], %s448
        %s450 = sand.u32 %s171, 1
        %s451 = smul.addr %s450, 40
        %s452 = scalar_lea.vmem [#allocation9], %s451
        %p453 = pneg %p184
        %p454 = pneg %p181
        %p455 = pneg %p210
        %p456 = pneg %p207
        %p457 = scmp.lt.s32.totalorder %s31, 1
        %s458 = scalar_select %p457, %s31, 1
        %s459 = smul.addr %s458, 10
        %s460 = smul.addr %s459, 8
        %s461 = scalar_lea.vmem %s5, %s460
        %p462 = pneg %p236
        %p463 = pneg %p233
        %p464 = scmp.lt.s32.totalorder %s31, 1
        %s465 = scalar_select %p464, %s31, 1
        %s466 = smul.addr %s465, 10
        %s467 = smul.addr %s466, 8
        %s468 = scalar_lea.vmem %s6, %s467
        %s469 = smul.u32 %s31, 2
        %s470 = sadd.s32 %s469, %s32
        %s471 = smul.u32 2, %s470
        %s472 = smul.u32 %s31, 2
        %s473 = sadd.s32 %s472, %s32
        %s474 = smul.u32 2, %s473
        %s475 = smul.u32 %s31, 2
        %s476 = sadd.s32 %s475, %s32
        %s477 = smul.u32 2, %s476
        %s478 = smul.u32 %s31, 2
        %s479 = sadd.s32 %s478, %s32
        %s480 = smul.u32 2, %s479
        %s481 = smul.u32 %s31, 2
        %s482 = sadd.s32 %s481, %s32
        %s483 = smul.u32 2, %s482
        %p484 = scmp.lt.s32.totalorder %s31, 1
        %s485 = scalar_select %p484, %s31, 1
        %s486 = smul.addr %s485, 10
        %s487 = smul.addr %s486, 8
        %s488 = scalar_lea.vmem %s5, %s487
        %p489 = scmp.lt.s32.totalorder %s31, 1
        %s490 = scalar_select %p489, %s31, 1
        %s491 = smul.addr %s490, 10
        %s492 = smul.addr %s491, 8
        %s493 = scalar_lea.vmem %s6, %s492
        %p494 = scmp.eq.s32.totalorder %s32, 0
        // Predicated region
        $region61: #{tpu_custom_call.1} parent=39 // pred_check
          %p495 = pneg %p494
        $region62: #{tpu_custom_call.1} parent=39 // pred_check_branch
          %497 = sbr.rel (%p495) target = $region64
        $region63: #{tpu_custom_call.1} parent=39 // pred_region
          %498 = vst [vmem:[%s488] sm:$0xff] 0.0
          %499 = vst [vmem:[%s488 + $0x8] sm:$0xff] 0.0
          %500 = vst [vmem:[%s488 + $0x10] sm:$0xff] 0.0
          %501 = vst [vmem:[%s488 + $0x18] sm:$0xff] 0.0
          %502 = vst [vmem:[%s488 + $0x20] sm:$0x3] 0.0
          %503 = vst [vmem:[%s488 + $0x28] sm:$0xff] 0.0
          %504 = vst [vmem:[%s488 + $0x30] sm:$0xff] 0.0
          %505 = vst [vmem:[%s488 + $0x38] sm:$0xff] 0.0
          %506 = vst [vmem:[%s488 + $0x40] sm:$0xff] 0.0
          %507 = vst [vmem:[%s488 + $0x48] sm:$0x3] 0.0
          %508 = vst [vmem:[%s493] sm:$0xff] 0.0
          %509 = vst [vmem:[%s493 + $0x8] sm:$0xff] 0.0
          %510 = vst [vmem:[%s493 + $0x10] sm:$0xff] 0.0
          %511 = vst [vmem:[%s493 + $0x18] sm:$0xff] 0.0
          %512 = vst [vmem:[%s493 + $0x20] sm:$0x3] 0.0
          %513 = vst [vmem:[%s493 + $0x28] sm:$0xff] 0.0
          %514 = vst [vmem:[%s493 + $0x30] sm:$0xff] 0.0
          %515 = vst [vmem:[%s493 + $0x38] sm:$0xff] 0.0
          %516 = vst [vmem:[%s493 + $0x40] sm:$0xff] 0.0
          %517 = vst [vmem:[%s493 + $0x48] sm:$0x3] 0.0
        $region64: #{tpu_custom_call.1} parent=39 // pred_fallthru
          _
        %v518 = vld [vmem:[%s379] sm:$0x3]
        %v519 = vld [vmem:[%s388] sm:$0xf]
        %v520 = vld [vmem:[%s388 + $0x8] sm:$0xf]
        %v521 = vld [vmem:[%s388 + $0x10] sm:$0xf]
        %v522 = vld [vmem:[%s388 + $0x18] sm:$0xf]
        %v523 = vld [vmem:[%s388 + $0x20] sm:$0x1]
        %v524 = vunpack.c.l.bf16 %v519
        %v525 = vunpack.c.l.bf16 %v520
        %v526 = vunpack.c.l.bf16 %v521
        %v527 = vunpack.c.l.bf16 %v522
        %v528 = vunpack.c.l.bf16 %v523
        %v529 = vld [vmem:[%s397] sm:$0xf]
        %v530 = vld [vmem:[%s397 + $0x8] sm:$0xf]
        %v531 = vld [vmem:[%s397 + $0x10] sm:$0xf]
        %v532 = vld [vmem:[%s397 + $0x18] sm:$0xf]
        %v533 = vld [vmem:[%s397 + $0x20] sm:$0x1]
        %v534 = vunpack.c.l.bf16 %v529
        %v535 = vunpack.c.l.bf16 %v530
        %v536 = vunpack.c.l.bf16 %v531
        %v537 = vunpack.c.l.bf16 %v532
        %v538 = vunpack.c.l.bf16 %v533
        %v539 = vld [vmem:[%s406] sm:$0xf]
        %v540 = vld [vmem:[%s406 + $0x8] sm:$0xf]
        %v541 = vld [vmem:[%s406 + $0x10] sm:$0xf]
        %v542 = vld [vmem:[%s406 + $0x18] sm:$0xf]
        %v543 = vld [vmem:[%s406 + $0x20] sm:$0x1]
        %v544 = vunpack.c.l.bf16 %v539
        %v545 = vunpack.c.l.bf16 %v540
        %v546 = vunpack.c.l.bf16 %v541
        %v547 = vunpack.c.l.bf16 %v542
        %v548 = vunpack.c.l.bf16 %v543
        %v549 = vld [vmem:[%s415] sm:$0xf]
        %v550 = vld [vmem:[%s415 + $0x8] sm:$0xf]
        %v551 = vld [vmem:[%s415 + $0x10] sm:$0xf]
        %v552 = vld [vmem:[%s415 + $0x18] sm:$0xf]
        %v553 = vld [vmem:[%s415 + $0x20] sm:$0x1]
        %v554 = vunpack.c.l.bf16 %v549
        %v555 = vunpack.c.l.bf16 %v550
        %v556 = vunpack.c.l.bf16 %v551
        %v557 = vunpack.c.l.bf16 %v552
        %v558 = vunpack.c.l.bf16 %v553
        %v561 = vunpack.c.l.s4 1966171168
        %v562 = vunpack.c.0.s8 %v561
        %v563 = vlaneseq
        %v564 = vshrl.u32 %v563, 7
        %v565 = vsub.s32 %v562, %v564
        %v566 = vrot.slane %v518, %v565
        %v567 = vcombine.high %v566, %v566
        %v568 = vlaneseq
        %v569 = vshrl.u32 %v568, 7
        %v570 = vsub.s32 0, %v569
        %v571 = vrot.slane %v566, %v570
        %v572 = vlaneseq
        %v573 = vshrl.u32 %v572, 7
        %v574 = vsub.s32 0, %v573
        %v575 = vrot.slane %v567, %v574
        %v578 = vsub.f32 %v571, %v524
        %v579 = vsub.f32 %v571, %v525
        %v580 = vsub.f32 %v571, %v526
        %v581 = vsub.f32 %v571, %v527
        %v582 = vsub.f32 %v571, %v528
        %v583 = vsub.f32 %v575, %v524
        %v584 = vsub.f32 %v575, %v525
        %v585 = vsub.f32 %v575, %v526
        %v586 = vsub.f32 %v575, %v527
        %v587 = vsub.f32 %v575, %v528
        %v588 = vmul.f32 %v534, %v578
        %v589 = vmul.f32 %v535, %v579
        %v590 = vmul.f32 %v536, %v580
        %v591 = vmul.f32 %v537, %v581
        %v592 = vmul.f32 %v538, %v582
        %v593 = vmul.f32 %v534, %v583
        %v594 = vmul.f32 %v535, %v584
        %v595 = vmul.f32 %v536, %v585
        %v596 = vmul.f32 %v537, %v586
        %v597 = vmul.f32 %v538, %v587
        %v598 = vxor.u32 %v588, 2147483648
        %v599 = vxor.u32 %v589, 2147483648
        %v600 = vxor.u32 %v590, 2147483648
        %v601 = vxor.u32 %v591, 2147483648
        %v602 = vxor.u32 %v592, 2147483648
        %v603 = vxor.u32 %v593, 2147483648
        %v604 = vxor.u32 %v594, 2147483648
        %v605 = vxor.u32 %v595, 2147483648
        %v606 = vxor.u32 %v596, 2147483648
        %v607 = vxor.u32 %v597, 2147483648
        %v608 = vmul.f32 %v598, 1.442695
        %v609 = vpow.pop %v608
        %v610 = vmul.f32 %v599, 1.442695
        %v611 = vpow.pop %v610
        %v612 = vmul.f32 %v600, 1.442695
        %v613 = vpow.pop %v612
        %v614 = vmul.f32 %v601, 1.442695
        %v615 = vpow.pop %v614
        %v616 = vmul.f32 %v602, 1.442695
        %v617 = vpow.pop %v616
        %v618 = vmul.f32 %v603, 1.442695
        %v619 = vpow.pop %v618
        %v620 = vmul.f32 %v604, 1.442695
        %v621 = vpow.pop %v620
        %v622 = vmul.f32 %v605, 1.442695
        %v623 = vpow.pop %v622
        %v624 = vmul.f32 %v606, 1.442695
        %v625 = vpow.pop %v624
        %v626 = vmul.f32 %v607, 1.442695
        %v627 = vpow.pop %v626
        %v628 = vadd.f32 %v609, 1.0
        %v629 = vadd.f32 %v611, 1.0
        %v630 = vadd.f32 %v613, 1.0
        %v631 = vadd.f32 %v615, 1.0
        %v632 = vadd.f32 %v617, 1.0
        %v633 = vadd.f32 %v619, 1.0
        %v634 = vadd.f32 %v621, 1.0
        %v635 = vadd.f32 %v623, 1.0
        %v636 = vadd.f32 %v625, 1.0
        %v637 = vadd.f32 %v627, 1.0
        %v638 = vrcp.pop %v628
        %v639 = vmul.f32 1.0, %v638
        %v640 = vrcp.pop %v629
        %v641 = vmul.f32 1.0, %v640
        %v642 = vrcp.pop %v630
        %v643 = vmul.f32 1.0, %v642
        %v644 = vrcp.pop %v631
        %v645 = vmul.f32 1.0, %v644
        %v646 = vrcp.pop %v632
        %v647 = vmul.f32 1.0, %v646
        %v648 = vrcp.pop %v633
        %v649 = vmul.f32 1.0, %v648
        %v650 = vrcp.pop %v634
        %v651 = vmul.f32 1.0, %v650
        %v652 = vrcp.pop %v635
        %v653 = vmul.f32 1.0, %v652
        %v654 = vrcp.pop %v636
        %v655 = vmul.f32 1.0, %v654
        %v656 = vrcp.pop %v637
        %v657 = vmul.f32 1.0, %v656
        %v658 = vmul.f32 %v554, %v639
        %v659 = vmul.f32 %v555, %v641
        %v660 = vmul.f32 %v556, %v643
        %v661 = vmul.f32 %v557, %v645
        %v662 = vmul.f32 %v558, %v647
        %v663 = vmul.f32 %v554, %v649
        %v664 = vmul.f32 %v555, %v651
        %v665 = vmul.f32 %v556, %v653
        %v666 = vmul.f32 %v557, %v655
        %v667 = vmul.f32 %v558, %v657
        %v668 = vmul.f32 %v544, %v639
        %v669 = vmul.f32 %v545, %v641
        %v670 = vmul.f32 %v546, %v643
        %v671 = vmul.f32 %v547, %v645
        %v672 = vmul.f32 %v548, %v647
        %v673 = vmul.f32 %v544, %v649
        %v674 = vmul.f32 %v545, %v651
        %v675 = vmul.f32 %v546, %v653
        %v676 = vmul.f32 %v547, %v655
        %v677 = vmul.f32 %v548, %v657
        %v678 = vld [vmem:[%s379 + $0x2] sm:$0x3]
        %v679 = vld [vmem:[%s388 + $0x4] sm:$0xf]
        %v680 = vld [vmem:[%s388 + $0xc] sm:$0xf]
        %v681 = vld [vmem:[%s388 + $0x14] sm:$0xf]
        %v682 = vld [vmem:[%s388 + $0x1c] sm:$0xf]
        %v683 = vld [vmem:[%s388 + $0x24] sm:$0x1]
        %v684 = vunpack.c.l.bf16 %v679
        %v685 = vunpack.c.l.bf16 %v680
        %v686 = vunpack.c.l.bf16 %v681
        %v687 = vunpack.c.l.bf16 %v682
        %v688 = vunpack.c.l.bf16 %v683
        %v689 = vld [vmem:[%s397 + $0x4] sm:$0xf]
        %v690 = vld [vmem:[%s397 + $0xc] sm:$0xf]
        %v691 = vld [vmem:[%s397 + $0x14] sm:$0xf]
        %v692 = vld [vmem:[%s397 + $0x1c] sm:$0xf]
        %v693 = vld [vmem:[%s397 + $0x24] sm:$0x1]
        %v694 = vunpack.c.l.bf16 %v689
        %v695 = vunpack.c.l.bf16 %v690
        %v696 = vunpack.c.l.bf16 %v691
        %v697 = vunpack.c.l.bf16 %v692
        %v698 = vunpack.c.l.bf16 %v693
        %v699 = vld [vmem:[%s406 + $0x4] sm:$0xf]
        %v700 = vld [vmem:[%s406 + $0xc] sm:$0xf]
        %v701 = vld [vmem:[%s406 + $0x14] sm:$0xf]
        %v702 = vld [vmem:[%s406 + $0x1c] sm:$0xf]
        %v703 = vld [vmem:[%s406 + $0x24] sm:$0x1]
        %v704 = vunpack.c.l.bf16 %v699
        %v705 = vunpack.c.l.bf16 %v700
        %v706 = vunpack.c.l.bf16 %v701
        %v707 = vunpack.c.l.bf16 %v702
        %v708 = vunpack.c.l.bf16 %v703
        %v709 = vld [vmem:[%s415 + $0x4] sm:$0xf]
        %v710 = vld [vmem:[%s415 + $0xc] sm:$0xf]
        %v711 = vld [vmem:[%s415 + $0x14] sm:$0xf]
        %v712 = vld [vmem:[%s415 + $0x1c] sm:$0xf]
        %v713 = vld [vmem:[%s415 + $0x24] sm:$0x1]
        %v714 = vunpack.c.l.bf16 %v709
        %v715 = vunpack.c.l.bf16 %v710
        %v716 = vunpack.c.l.bf16 %v711
        %v717 = vunpack.c.l.bf16 %v712
        %v718 = vunpack.c.l.bf16 %v713
        %v721 = vunpack.c.l.s4 1966171168
        %v722 = vunpack.c.0.s8 %v721
        %v723 = vlaneseq
        %v724 = vshrl.u32 %v723, 7
        %v725 = vsub.s32 %v722, %v724
        %v726 = vrot.slane %v678, %v725
        %v727 = vcombine.high %v726, %v726
        %v728 = vlaneseq
        %v729 = vshrl.u32 %v728, 7
        %v730 = vsub.s32 0, %v729
        %v731 = vrot.slane %v726, %v730
        %v732 = vlaneseq
        %v733 = vshrl.u32 %v732, 7
        %v734 = vsub.s32 0, %v733
        %v735 = vrot.slane %v727, %v734
        %v738 = vsub.f32 %v731, %v684
        %v739 = vsub.f32 %v731, %v685
        %v740 = vsub.f32 %v731, %v686
        %v741 = vsub.f32 %v731, %v687
        %v742 = vsub.f32 %v731, %v688
        %v743 = vsub.f32 %v735, %v684
        %v744 = vsub.f32 %v735, %v685
        %v745 = vsub.f32 %v735, %v686
        %v746 = vsub.f32 %v735, %v687
        %v747 = vsub.f32 %v735, %v688
        %v748 = vmul.f32 %v694, %v738
        %v749 = vmul.f32 %v695, %v739
        %v750 = vmul.f32 %v696, %v740
        %v751 = vmul.f32 %v697, %v741
        %v752 = vmul.f32 %v698, %v742
        %v753 = vmul.f32 %v694, %v743
        %v754 = vmul.f32 %v695, %v744
        %v755 = vmul.f32 %v696, %v745
        %v756 = vmul.f32 %v697, %v746
        %v757 = vmul.f32 %v698, %v747
        %v758 = vxor.u32 %v748, 2147483648
        %v759 = vxor.u32 %v749, 2147483648
        %v760 = vxor.u32 %v750, 2147483648
        %v761 = vxor.u32 %v751, 2147483648
        %v762 = vxor.u32 %v752, 2147483648
        %v763 = vxor.u32 %v753, 2147483648
        %v764 = vxor.u32 %v754, 2147483648
        %v765 = vxor.u32 %v755, 2147483648
        %v766 = vxor.u32 %v756, 2147483648
        %v767 = vxor.u32 %v757, 2147483648
        %v768 = vmul.f32 %v758, 1.442695
        %v769 = vpow.pop %v768
        %v770 = vmul.f32 %v759, 1.442695
        %v771 = vpow.pop %v770
        %v772 = vmul.f32 %v760, 1.442695
        %v773 = vpow.pop %v772
        %v774 = vmul.f32 %v761, 1.442695
        %v775 = vpow.pop %v774
        %v776 = vmul.f32 %v762, 1.442695
        %v777 = vpow.pop %v776
        %v778 = vmul.f32 %v763, 1.442695
        %v779 = vpow.pop %v778
        %v780 = vmul.f32 %v764, 1.442695
        %v781 = vpow.pop %v780
        %v782 = vmul.f32 %v765, 1.442695
        %v783 = vpow.pop %v782
        %v784 = vmul.f32 %v766, 1.442695
        %v785 = vpow.pop %v784
        %v786 = vmul.f32 %v767, 1.442695
        %v787 = vpow.pop %v786
        %v788 = vadd.f32 %v769, 1.0
        %v789 = vadd.f32 %v771, 1.0
        %v790 = vadd.f32 %v773, 1.0
        %v791 = vadd.f32 %v775, 1.0
        %v792 = vadd.f32 %v777, 1.0
        %v793 = vadd.f32 %v779, 1.0
        %v794 = vadd.f32 %v781, 1.0
        %v795 = vadd.f32 %v783, 1.0
        %v796 = vadd.f32 %v785, 1.0
        %v797 = vadd.f32 %v787, 1.0
        %v798 = vrcp.pop %v788
        %v799 = vmul.f32 1.0, %v798
        %v800 = vrcp.pop %v789
        %v801 = vmul.f32 1.0, %v800
        %v802 = vrcp.pop %v790
        %v803 = vmul.f32 1.0, %v802
        %v804 = vrcp.pop %v791
        %v805 = vmul.f32 1.0, %v804
        %v806 = vrcp.pop %v792
        %v807 = vmul.f32 1.0, %v806
        %v808 = vrcp.pop %v793
        %v809 = vmul.f32 1.0, %v808
        %v810 = vrcp.pop %v794
        %v811 = vmul.f32 1.0, %v810
        %v812 = vrcp.pop %v795
        %v813 = vmul.f32 1.0, %v812
        %v814 = vrcp.pop %v796
        %v815 = vmul.f32 1.0, %v814
        %v816 = vrcp.pop %v797
        %v817 = vmul.f32 1.0, %v816
        %v818 = vmul.f32 %v714, %v799
        %v819 = vmul.f32 %v715, %v801
        %v820 = vmul.f32 %v716, %v803
        %v821 = vmul.f32 %v717, %v805
        %v822 = vmul.f32 %v718, %v807
        %v823 = vmul.f32 %v714, %v809
        %v824 = vmul.f32 %v715, %v811
        %v825 = vmul.f32 %v716, %v813
        %v826 = vmul.f32 %v717, %v815
        %v827 = vmul.f32 %v718, %v817
        %v828 = vmul.f32 %v704, %v799
        %v829 = vmul.f32 %v705, %v801
        %v830 = vmul.f32 %v706, %v803
        %v831 = vmul.f32 %v707, %v805
        %v832 = vmul.f32 %v708, %v807
        %v833 = vmul.f32 %v704, %v809
        %v834 = vmul.f32 %v705, %v811
        %v835 = vmul.f32 %v706, %v813
        %v836 = vmul.f32 %v707, %v815
        %v837 = vmul.f32 %v708, %v817
        %v838 = vadd.f32 %v658, %v818
        %v839 = vadd.f32 %v659, %v819
        %v840 = vadd.f32 %v660, %v820
        %v841 = vadd.f32 %v661, %v821
        %v842 = vadd.f32 %v662, %v822
        %v843 = vadd.f32 %v663, %v823
        %v844 = vadd.f32 %v664, %v824
        %v845 = vadd.f32 %v665, %v825
        %v846 = vadd.f32 %v666, %v826
        %v847 = vadd.f32 %v667, %v827
        %v848 = vadd.f32 %v668, %v828
        %v849 = vadd.f32 %v669, %v829
        %v850 = vadd.f32 %v670, %v830
        %v851 = vadd.f32 %v671, %v831
        %v852 = vadd.f32 %v672, %v832
        %v853 = vadd.f32 %v673, %v833
        %v854 = vadd.f32 %v674, %v834
        %v855 = vadd.f32 %v675, %v835
        %v856 = vadd.f32 %v676, %v836
        %v857 = vadd.f32 %v677, %v837
        %v858 = vld [vmem:[%s488] sm:$0xff]
        %v859 = vld [vmem:[%s488 + $0x8] sm:$0xff]
        %v860 = vld [vmem:[%s488 + $0x10] sm:$0xff]
        %v861 = vld [vmem:[%s488 + $0x18] sm:$0xff]
        %v862 = vld [vmem:[%s488 + $0x20] sm:$0x3]
        %v863 = vld [vmem:[%s488 + $0x28] sm:$0xff]
        %v864 = vld [vmem:[%s488 + $0x30] sm:$0xff]
        %v865 = vld [vmem:[%s488 + $0x38] sm:$0xff]
        %v866 = vld [vmem:[%s488 + $0x40] sm:$0xff]
        %v867 = vld [vmem:[%s488 + $0x48] sm:$0x3]
        %v868 = vadd.f32 %v858, %v838
        %v869 = vadd.f32 %v859, %v839
        %v870 = vadd.f32 %v860, %v840
        %v871 = vadd.f32 %v861, %v841
        %v872 = vadd.f32 %v862, %v842
        %v873 = vadd.f32 %v863, %v843
        %v874 = vadd.f32 %v864, %v844
        %v875 = vadd.f32 %v865, %v845
        %v876 = vadd.f32 %v866, %v846
        %v877 = vadd.f32 %v867, %v847
        %878 = vst [vmem:[%s488] sm:$0xff] %v868
        %879 = vst [vmem:[%s488 + $0x8] sm:$0xff] %v869
        %880 = vst [vmem:[%s488 + $0x10] sm:$0xff] %v870
        %881 = vst [vmem:[%s488 + $0x18] sm:$0xff] %v871
        %882 = vst [vmem:[%s488 + $0x20] sm:$0x3] %v872
        %883 = vst [vmem:[%s488 + $0x28] sm:$0xff] %v873
        %884 = vst [vmem:[%s488 + $0x30] sm:$0xff] %v874
        %885 = vst [vmem:[%s488 + $0x38] sm:$0xff] %v875
        %886 = vst [vmem:[%s488 + $0x40] sm:$0xff] %v876
        %887 = vst [vmem:[%s488 + $0x48] sm:$0x3] %v877
        %v888 = vld [vmem:[%s493] sm:$0xff]
        %v889 = vld [vmem:[%s493 + $0x8] sm:$0xff]
        %v890 = vld [vmem:[%s493 + $0x10] sm:$0xff]
        %v891 = vld [vmem:[%s493 + $0x18] sm:$0xff]
        %v892 = vld [vmem:[%s493 + $0x20] sm:$0x3]
        %v893 = vld [vmem:[%s493 + $0x28] sm:$0xff]
        %v894 = vld [vmem:[%s493 + $0x30] sm:$0xff]
        %v895 = vld [vmem:[%s493 + $0x38] sm:$0xff]
        %v896 = vld [vmem:[%s493 + $0x40] sm:$0xff]
        %v897 = vld [vmem:[%s493 + $0x48] sm:$0x3]
        %v898 = vadd.f32 %v888, %v848
        %v899 = vadd.f32 %v889, %v849
        %v900 = vadd.f32 %v890, %v850
        %v901 = vadd.f32 %v891, %v851
        %v902 = vadd.f32 %v892, %v852
        %v903 = vadd.f32 %v893, %v853
        %v904 = vadd.f32 %v894, %v854
        %v905 = vadd.f32 %v895, %v855
        %v906 = vadd.f32 %v896, %v856
        %v907 = vadd.f32 %v897, %v857
        %908 = vst [vmem:[%s493] sm:$0xff] %v898
        %909 = vst [vmem:[%s493 + $0x8] sm:$0xff] %v899
        %910 = vst [vmem:[%s493 + $0x10] sm:$0xff] %v900
        %911 = vst [vmem:[%s493 + $0x18] sm:$0xff] %v901
        %912 = vst [vmem:[%s493 + $0x20] sm:$0x3] %v902
        %913 = vst [vmem:[%s493 + $0x28] sm:$0xff] %v903
        %914 = vst [vmem:[%s493 + $0x30] sm:$0xff] %v904
        %915 = vst [vmem:[%s493 + $0x38] sm:$0xff] %v905
        %916 = vst [vmem:[%s493 + $0x40] sm:$0xff] %v906
        %917 = vst [vmem:[%s493 + $0x48] sm:$0x3] %v907
        %p918 = scmp.lt.s32.totalorder %s31, 1
        %s919 = scalar_select %p918, %s31, 1
        %s920 = smul.addr %s919, 10
        %s921 = smul.addr %s920, 8
        %s922 = scalar_lea.vmem %s5, %s921
        %p923 = scmp.lt.s32.totalorder %s31, 1
        %s924 = scalar_select %p923, %s31, 1
        %s925 = smul.addr %s924, 10
        %s926 = smul.addr %s925, 8
        %s927 = scalar_lea.vmem %s6, %s926
        // Predicated region
        $region65: #{tpu_custom_call.1} parent=39 // pred_check
          %p928 = pneg %p207
        $region66: #{tpu_custom_call.1} parent=39 // pred_check_branch
          %930 = sbr.rel (%p928) target = $region68
        $region67: #{tpu_custom_call.1} parent=39 // pred_region
          _
        $region68: #{tpu_custom_call.1} parent=39 // pred_fallthru
          _
        // Predicated region
        $region69: #{tpu_custom_call.1} parent=39 // pred_check
          %p931 = pneg %p233
        $region70: #{tpu_custom_call.1} parent=39 // pred_check_branch
          %933 = sbr.rel (%p931) target = $region72
        $region71: #{tpu_custom_call.1} parent=39 // pred_region
          _
        $region72: #{tpu_custom_call.1} parent=39 // pred_fallthru
          _
      $region40: #{tpu_custom_call.1} parent=5 // pred_fallthru
        _
      %p934 = scmp.le.s32.totalorder 2, %s22
      // Predicated region
      $region73: #{tpu_custom_call.1} parent=5 // pred_check
        %p935 = pneg %p934
      $region74: #{tpu_custom_call.1} parent=5 // pred_check_branch
        %937 = sbr.rel (%p935) target = $region76
      $region75: #{tpu_custom_call.1} parent=5 // pred_region
        %s938 = ssub.s32 %s22, 2
        // Predicated region
        $region77: #{tpu_custom_call.1} parent=75 // pred_check
          %p939 = pneg %p213
        $region78: #{tpu_custom_call.1} parent=75 // pred_check_branch
          %941 = sbr.rel (%p939) target = $region80
        $region79: #{tpu_custom_call.1} parent=75 // pred_region
          %p942 = scmp.lt.s32.totalorder %s33, 1
          %s943 = scalar_select %p942, %s33, 1
          %s944 = smul.addr %s943, 10
          %s945 = smul.addr %s944, 8
          %s946 = scalar_lea.vmem %s5, %s945
        $region80: #{tpu_custom_call.1} parent=75 // pred_fallthru
          _
        // Predicated region
        $region81: #{tpu_custom_call.1} parent=75 // pred_check
          %p947 = pneg %p239
        $region82: #{tpu_custom_call.1} parent=75 // pred_check_branch
          %949 = sbr.rel (%p947) target = $region84
        $region83: #{tpu_custom_call.1} parent=75 // pred_region
          %p950 = scmp.lt.s32.totalorder %s33, 1
          %s951 = scalar_select %p950, %s33, 1
          %s952 = smul.addr %s951, 10
          %s953 = smul.addr %s952, 8
          %s954 = scalar_lea.vmem %s6, %s953
        $region84: #{tpu_custom_call.1} parent=75 // pred_fallthru
          _
      $region76: #{tpu_custom_call.1} parent=5 // pred_fallthru
        _
    $region6: #{tpu_custom_call.1} parent=1 // loop_footer
      %s26 = sadd.s32 1, %s22
    $region7: #{tpu_custom_call.1} parent=1 // loop_footer_branch
      %21 = sbr.rel target = $region3
    $region8: #{tpu_custom_call.1} parent=1 // loop_exit
      _
    %955 = vsyncpa [#allocation3], 1
    %s956 = scalar_lea.sflag [#allocation3], 1
    %957 = vsyncpa %s956, 1
    %958 = vsyncpa [#allocation5], 1
    %s959 = scalar_lea.sflag [#allocation5], 1
    %960 = vsyncpa %s959, 1
    %961 = vsyncpa [#allocation8], 1
    %s962 = scalar_lea.sflag [#allocation8], 1
    %963 = vsyncpa %s962, 1

</llo_original>
